<compile_context>
chip_gen: v7x
topology: tpu7x:2x2x1
jax: 0.10.0
libtpu: 0.0.40
codegen_flags: <defaults>
</compile_context>

<pallas_src>
import functools

import jax
import jax.numpy as jnp
import numpy as np
from jax.experimental import pallas as pl
from jax.experimental.pallas import tpu as pltpu


def _deepcluster_loss_kernel(preds_ref, tgt_ref, out_ref, *, inv_temp):
    # preds_ref: (TN, C) native dtype, tgt_ref: (TN, 1) int32, out_ref: (8, 128) f32
    v = pl.program_id(1)
    nb = pl.program_id(2)

    # First step of the (V, N-tile) reduction for this prototype: zero the
    # resident accumulator block.
    @pl.when(jnp.logical_and(v == 0, nb == 0))
    def _():
        out_ref[...] = jnp.zeros_like(out_ref)

    x = preds_ref[...].astype(jnp.float32) * inv_temp          # (TN, C) scaled logits
    t = tgt_ref[...]                                            # (TN, 1) int32 labels
    tn, c = x.shape

    # Fused logsumexp + target-select sweep over the same `shifted` tile.
    row_max = jnp.max(x, axis=-1, keepdims=True)                # (TN, 1)
    shifted = x - row_max                                       # (TN, C)
    sumexp = jnp.sum(jnp.exp(shifted), axis=-1, keepdims=True)  # (TN, 1)

    col = jax.lax.broadcasted_iota(jnp.int32, (1, c), 1)        # lane ids
    sel_shifted = jnp.sum(jnp.where(col == t, shifted, 0.0),
                          axis=-1, keepdims=True)               # (TN, 1) = x[m,t[m]]-max

    valid = t != -1                                             # ignore_index = -1
    # lse - x[m, t[m]] = log(sumexp) - sel_shifted  (row_max cancels)
    per_row = jnp.where(valid, jnp.log(sumexp) - sel_shifted, 0.0)

    tile_sum = jnp.sum(per_row)
    tile_cnt = jnp.sum(valid.astype(jnp.float32))

    # Accumulate (loss_sum -> lane 0, count -> lane 1) into the resident block.
    lane = jax.lax.broadcasted_iota(jnp.int32, out_ref.shape, 1)
    out_ref[...] += jnp.where(lane == 0, tile_sum,
                              jnp.where(lane == 1, tile_cnt, 0.0))


def _pick_block_n(n: int, c: int, itemsize: int, target_bytes: int = 4 << 20) -> int:
    """Largest row-tile that keeps one preds buffer under target_bytes and
    satisfies the (8, 128) block rule (multiple of 8, or the full axis)."""
    max_rows = max(8, target_bytes // max(1, c * itemsize))
    if n <= max_rows:
        return n
    best = None
    tn = 8
    while tn <= max_rows:
        if n % tn == 0:
            best = tn
        tn += 8
    # Fallback: no multiple-of-8 divisor under the cap -> take the full axis
    # (vmem_limit below is sized from the actual tile).
    return best if best is not None else n


def deepcluster_loss(preds, assignments, temperature: float = 0.1):
    P, V, N, C = preds.shape
    inv_temp = float(1.0 / temperature)

    # No V-fold tiling and no dtype upcast in the wrapper.
    targets = assignments.astype(jnp.int32).reshape(P, N, 1)

    TN = _pick_block_n(N, C, preds.dtype.itemsize)
    grid = (P, V, N // TN)

    preds_tile_bytes = TN * C * preds.dtype.itemsize
    tgt_tile_bytes = TN * 128 * 4        # int32 column tile, lane-padded to 128
    vmem_limit = int(min(100 << 20,
                         max(16 << 20, 4 * (preds_tile_bytes + tgt_tile_bytes))))

    out = pl.pallas_call(
        functools.partial(_deepcluster_loss_kernel, inv_temp=inv_temp),
        out_shape=jax.ShapeDtypeStruct((P, 8, 128), jnp.float32),
        grid_spec=pltpu.PrefetchScalarGridSpec(
            num_scalar_prefetch=0,
            grid=grid,
            in_specs=[
                # preds (P, V, N, C) -> kernel sees (TN, C)
                pl.BlockSpec((None, None, TN, C), lambda p, v, n: (p, v, n, 0)),
                # assignments (P, N, 1) -> kernel sees (TN, 1); index_map ignores v
                pl.BlockSpec((None, TN, 1), lambda p, v, n: (p, n, 0)),
            ],
            # per-prototype accumulator, resident across the (v, n) reduction axes
            out_specs=pl.BlockSpec((None, 8, 128), lambda p, v, n: (p, 0, 0)),
        ),
        compiler_params=pltpu.CompilerParams(
            dimension_semantics=("parallel", "arbitrary", "arbitrary"),
            vmem_limit_bytes=vmem_limit,
        ),
    )(preds, targets)

    loss_sum = out[:, 0, 0]     # (P,) sum of per-row CE over non-ignored rows
    count = out[:, 0, 1]        # (P,) number of non-ignored rows (V*N_valid)
    # count == 0 -> 0/0 = NaN, matching torch's cross_entropy mean reduction.
    per_p = loss_sum / count
    return jnp.mean(per_p)      # (1/P) * sum_p CE_p


def _reference_loss(preds, assignments, temperature=0.1):
    """Plain-JAX reference mirroring torch F.cross_entropy(ignore_index=-1)."""
    P, V, N, C = preds.shape
    total = 0.0
    for p in range(P):
        logits = preds[p].reshape(-1, C).astype(jnp.float32) / temperature
        tgt = jnp.tile(assignments[p], (V,))
        logz = jax.nn.logsumexp(logits, axis=-1)
        sel = jnp.take_along_axis(
            logits, jnp.clip(tgt, 0, C - 1)[:, None], axis=-1
        )[:, 0]
        valid = tgt != -1
        per_row = jnp.where(valid, logz - sel, 0.0)
        total += jnp.sum(per_row) / jnp.sum(valid.astype(jnp.float32))
    return total / P


if __name__ == "__main__":
    key = jax.random.PRNGKey(0)
    P, V, N, C = 2, 2, 16, 128

    k_preds, k_assign = jax.random.split(key)
    preds = jax.random.normal(k_preds, (P, V, N, C), dtype=jnp.float32)
    assignments = jax.random.randint(k_assign, (P, N), 0, C, dtype=jnp.int32)
    # Exercise ignore_index=-1 on one sample.
    assignments = assignments.at[0, 0].set(-1)

    loss = jax.block_until_ready(deepcluster_loss(preds, assignments, 0.1))
    ref = jax.block_until_ready(_reference_loss(preds, assignments, 0.1))

    assert np.allclose(np.asarray(loss), np.asarray(ref), rtol=1e-5, atol=1e-5), (
        loss, ref)

    print("KERNEL_OK")
</pallas_src>

<mosaic_0001>
module attributes {stable_mosaic.version = 11 : i64} {
  func.func @_deepcluster_loss_kernel(%arg0: i32, %arg1: i32, %arg2: i32, %arg3: memref<1x1x16x128xf32, #tpu.memory_space<vmem>>, %arg4: memref<1x16x1xi32, #tpu.memory_space<vmem>>, %arg5: memref<1x8x128xf32, #tpu.memory_space<vmem>>) attributes {dimension_semantics = [#tpu.dimension_semantics<parallel>, #tpu.dimension_semantics<arbitrary>, #tpu.dimension_semantics<arbitrary>], iteration_bounds = array<i64: 2, 2, 1>, scalar_prefetch = 0 : i64, scratch_operands = 0 : i64, tpu.core_type = #tpu.core_type<tc>, window_params = [{transform_indices = @transform_0, window_bounds = array<i64: 1, 1, 16, 128>}, {transform_indices = @transform_1, window_bounds = array<i64: 1, 16, 1>}, {transform_indices = @transform_2, window_bounds = array<i64: 1, 8, 128>}]} {
    %c0_i32 = arith.constant 0 : i32
    %0 = arith.cmpi eq, %arg1, %c0_i32 : i32
    %c0_i32_0 = arith.constant 0 : i32
    %1 = arith.cmpi eq, %arg2, %c0_i32_0 : i32
    %2 = arith.andi %0, %1 : i1
    %3 = arith.extui %2 : i1 to i32
    %c0_i32_1 = arith.constant 0 : i32
    %4 = arith.cmpi ne, %3, %c0_i32_1 : i32
    scf.if %4 {
      %cst_23 = arith.constant 0.000000e+00 : f32
      %58 = vector.broadcast %cst_23 : f32 to vector<8x128xf32>
      %c0_24 = arith.constant 0 : index
      %c0_25 = arith.constant 0 : index
      %c0_26 = arith.constant 0 : index
      %59 = vector.load %arg5[%c0_24, %c0_25, %c0_26] : memref<1x8x128xf32, #tpu.memory_space<vmem>>, vector<1x8x128xf32>
      %60 = vector.shape_cast %59 : vector<1x8x128xf32> to vector<8x128xf32>
      %61 = vector.shape_cast %58 : vector<8x128xf32> to vector<1x8x128xf32>
      tpu.vector_store %arg5[%c0_24, %c0_25, %c0_26], %61 {strides = array<i32>} : memref<1x8x128xf32, #tpu.memory_space<vmem>>, vector<1x8x128xf32>,
    } else {
    }
    %c0 = arith.constant 0 : index
    %c0_2 = arith.constant 0 : index
    %c0_3 = arith.constant 0 : index
    %c0_4 = arith.constant 0 : index
    %5 = vector.load %arg3[%c0, %c0_2, %c0_3, %c0_4] : memref<1x1x16x128xf32, #tpu.memory_space<vmem>>, vector<1x1x16x128xf32>
    %6 = vector.shape_cast %5 : vector<1x1x16x128xf32> to vector<16x128xf32>
    %cst = arith.constant 1.000000e+01 : f32
    %7 = vector.broadcast %cst : f32 to vector<16x128xf32>
    %8 = arith.mulf %6, %7 : vector<16x128xf32>
    %c0_5 = arith.constant 0 : index
    %c0_6 = arith.constant 0 : index
    %c0_7 = arith.constant 0 : index
    %9 = vector.load %arg4[%c0_5, %c0_6, %c0_7] : memref<1x16x1xi32, #tpu.memory_space<vmem>>, vector<1x16x1xi32>
    %10 = vector.shape_cast %9 : vector<1x16x1xi32> to vector<16x1xi32>
    %cst_8 = arith.constant dense<0xFF800000> : vector<16xf32>
    %11 = vector.multi_reduction <maximumf>, %8, %cst_8 [1] : vector<16x128xf32> to vector<16xf32>
    %12 = vector.shape_cast %11 : vector<16xf32> to vector<16x1xf32>
    %13 = vector.broadcast %12 : vector<16x1xf32> to vector<16x128xf32>
    %14 = arith.subf %8, %13 : vector<16x128xf32>
    %15 = math.exp %14 : vector<16x128xf32>
    %cst_9 = arith.constant dense<0.000000e+00> : vector<16xf32>
    %16 = vector.multi_reduction <add>, %15, %cst_9 [1] : vector<16x128xf32> to vector<16xf32>
    %17 = vector.shape_cast %16 : vector<16xf32> to vector<16x1xf32>
    %18 = tpu.iota {dimensions = array<i32: 1>} : vector<1x128xi32>
    %19 = vector.broadcast %18 : vector<1x128xi32> to vector<16x128xi32>
    %20 = vector.broadcast %10 : vector<16x1xi32> to vector<16x128xi32>
    %21 = arith.cmpi eq, %19, %20 : vector<16x128xi32>
    %cst_10 = arith.constant 0.000000e+00 : f32
    %22 = vector.broadcast %cst_10 : f32 to vector<16x128xf32>
    %23 = arith.select %21, %14, %22 : vector<16x128xi1>, vector<16x128xf32>
    %cst_11 = arith.constant dense<0.000000e+00> : vector<16xf32>
    %24 = vector.multi_reduction <add>, %23, %cst_11 [1] : vector<16x128xf32> to vector<16xf32>
    %25 = vector.shape_cast %24 : vector<16xf32> to vector<16x1xf32>
    %c-1_i32 = arith.constant -1 : i32
    %26 = vector.broadcast %c-1_i32 : i32 to vector<16x1xi32>
    %27 = arith.cmpi ne, %10, %26 : vector<16x1xi32>
    %28 = math.log %17 : vector<16x1xf32>
    %29 = arith.subf %28, %25 : vector<16x1xf32>
    %cst_12 = arith.constant 0.000000e+00 : f32
    %30 = vector.broadcast %cst_12 : f32 to vector<16x1xf32>
    %31 = arith.select %27, %29, %30 : vector<16x1xi1>, vector<16x1xf32>
    %32 = vector.shape_cast %31 : vector<16x1xf32> to vector<1x16x1xf32>
    %cst_13 = arith.constant dense<0.000000e+00> : vector<1xf32>
    %33 = vector.multi_reduction <add>, %32, %cst_13 [1, 2] : vector<1x16x1xf32> to vector<1xf32>
    %34 = vector.shape_cast %33 : vector<1xf32> to vector<1x1x1xf32>
    %35 = vector.extract %34[0, 0, 0] : f32 from vector<1x1x1xf32>
    %36 = arith.extui %27 : vector<16x1xi1> to vector<16x1xi32>
    %37 = arith.sitofp %36 : vector<16x1xi32> to vector<16x1xf32>
    %38 = vector.shape_cast %37 : vector<16x1xf32> to vector<1x16x1xf32>
    %cst_14 = arith.constant dense<0.000000e+00> : vector<1xf32>
    %39 = vector.multi_reduction <add>, %38, %cst_14 [1, 2] : vector<1x16x1xf32> to vector<1xf32>
    %40 = vector.shape_cast %39 : vector<1xf32> to vector<1x1x1xf32>
    %41 = vector.extract %40[0, 0, 0] : f32 from vector<1x1x1xf32>
    %42 = tpu.iota {dimensions = array<i32: 1>} : vector<8x128xi32>
    %c0_15 = arith.constant 0 : index
    %c0_16 = arith.constant 0 : index
    %c0_17 = arith.constant 0 : index
    %43 = vector.load %arg5[%c0_15, %c0_16, %c0_17] : memref<1x8x128xf32, #tpu.memory_space<vmem>>, vector<1x8x128xf32>
    %44 = vector.shape_cast %43 : vector<1x8x128xf32> to vector<8x128xf32>
    %c0_i32_18 = arith.constant 0 : i32
    %45 = vector.broadcast %c0_i32_18 : i32 to vector<8x128xi32>
    %46 = arith.cmpi eq, %42, %45 : vector<8x128xi32>
    %c1_i32 = arith.constant 1 : i32
    %47 = vector.broadcast %c1_i32 : i32 to vector<8x128xi32>
    %48 = arith.cmpi eq, %42, %47 : vector<8x128xi32>
    %cst_19 = arith.constant 0.000000e+00 : f32
    %49 = vector.broadcast %41 : f32 to vector<8x128xf32>
    %50 = vector.broadcast %cst_19 : f32 to vector<8x128xf32>
    %51 = arith.select %48, %49, %50 : vector<8x128xi1>, vector<8x128xf32>
    %52 = vector.broadcast %35 : f32 to vector<8x128xf32>
    %53 = arith.select %46, %52, %51 : vector<8x128xi1>, vector<8x128xf32>
    %54 = arith.addf %44, %53 : vector<8x128xf32>
    %c0_20 = arith.constant 0 : index
    %c0_21 = arith.constant 0 : index
    %c0_22 = arith.constant 0 : index
    %55 = vector.load %arg5[%c0_20, %c0_21, %c0_22] : memref<1x8x128xf32, #tpu.memory_space<vmem>>, vector<1x8x128xf32>
    %56 = vector.shape_cast %55 : vector<1x8x128xf32> to vector<8x128xf32>
    %57 = vector.shape_cast %54 : vector<8x128xf32> to vector<1x8x128xf32>
    tpu.vector_store %arg5[%c0_20, %c0_21, %c0_22], %57 {strides = array<i32>} : memref<1x8x128xf32, #tpu.memory_space<vmem>>, vector<1x8x128xf32>,
    return
  }
  func.func @transform_0(%arg0: i32, %arg1: i32, %arg2: i32) -> (i32, i32, i32, i32) {
    %c0_i32 = arith.constant 0 : i32
    %c0_i32_0 = arith.constant 0 : i32
    return %arg0, %arg1, %arg2, %c0_i32 : i32, i32, i32, i32
  }
  func.func @transform_1(%arg0: i32, %arg1: i32, %arg2: i32) -> (i32, i32, i32) {
    %c0_i32 = arith.constant 0 : i32
    %c0_i32_0 = arith.constant 0 : i32
    return %arg0, %arg2, %c0_i32 : i32, i32, i32
  }
  func.func @transform_2(%arg0: i32, %arg1: i32, %arg2: i32) -> (i32, i32, i32) {
    %c0_i32 = arith.constant 0 : i32
    %c0_i32_0 = arith.constant 0 : i32
    %c0_i32_1 = arith.constant 0 : i32
    return %arg0, %c0_i32, %c0_i32_0 : i32, i32, i32
  }
}

</mosaic_0001>

<llo_original>
// kernel: tpu_custom_call.1
$region0: #{tpu_custom_call.1}
  #allocation0 [shape = 'u32[]', space=smem, size = 0x4, offset = 0x4, fixed_abs, tag = 'smem constant byte address 0x4 - core index']
  #allocation1 [shape = 'u32[144,128]{1,0:T(1,128)}', space=vmem, size = 0x12000, scoped, tag = 'internal scratch']
  %s0 = inlined_call_operand.hbm [shape: f32[2,2,16,128], index: 0, kind: input, shape index: {}]
  %s1 = inlined_call_operand.vmem [shape: s32[2,16,1], index: 1, kind: input, shape index: {}]
  %s2 = inlined_call_operand.hbm [shape: f32[2,8,128], index: 2, kind: output, shape index: {}]
  %s3 = sld [smem:[#allocation0]]
  $region49: #{tpu_custom_call.1} parent=0
    _
  %s5 = ssub.s32 1, %s3
  %s6 = scalar_select 0, %s5, %s3
  $region1: #{tpu_custom_call.1} parent=0
    #allocation2 [shape = 'u8[16384]{0}', space=vmem, size = 0x4000, scoped, tag = 'input window, operand 0']
    #allocation3 [shape = 's32[2]{0}', space=sflag, size = 0x8, scoped, tag = 'scoped memory for tpu_custom_call.1']
    #allocation4 [shape = 's32[2]{0}', space=sflag, size = 0x8, scoped, tag = 'scoped memory for tpu_custom_call.1']
    #allocation5 [shape = 'u8[8192]{0}', space=vmem, size = 0x2000, scoped, tag = 'output window, operand 0']
    %7 = vsyncpa [#allocation3], 0
    %s8 = scalar_lea.sflag [#allocation3], 1
    %9 = vsyncpa %s8, 0
    %10 = vsyncpa [#allocation4], 0
    %s11 = scalar_lea.sflag [#allocation4], 1
    %12 = vsyncpa %s11, 0
    loop: start=0, step=1, limit=6
    $region2: #{tpu_custom_call.1} parent=1 // loop_pre_header
      _
    $region3: #{tpu_custom_call.1} parent=1 // loop_header
      %s14 = sphi 0, %s18
      %p15 = scmp.ge.s32.totalorder %s14, 6
      %s21 = sphi 0, %s40
      %s22 = sphi 0, %s36
      %s23 = sphi 0, %s32
      %s24 = sphi 0, %s21
      %s25 = sphi 0, %s22
      %s26 = sphi 0, %s23
      %s27 = sphi 0, %s24
      %s28 = sphi 0, %s25
      %s29 = sphi 0, %s26
      %s47 = sphi 0, %s49
      %s50 = sphi 0, %s47
      %s51 = sphi 0, %s50
      %s67 = sphi 0, %s51
      %s75 = sphi 0, %s77
      %s78 = sphi 0, %s75
      %s79 = sphi 0, %s78
      %s95 = sphi 0, %s79
      %s101 = sphi 0, %s103
      %s104 = sphi 0, %s101
      %s105 = sphi 0, %s104
      %s121 = sphi 0, %s105
    $region4: #{tpu_custom_call.1} parent=1 // loop_header_branch
      %17 = sbr.rel (%p15) target = $region8
    $region5: #{tpu_custom_call.1} parent=1 // loop_body
      %s19 = ssub.s32 %s14, 1
      %s20 = ssub.s32 %s14, 2
      %s30 = sadd.s32 1, %s23
      %p31 = scmp.ge.s32.totalorder %s30, 1
      %s32 = scalar_select %p31, 0, %s30
      %s33 = sadd.s32 1, %s22
      %s34 = scalar_select %p31, %s33, %s22
      %p35 = scmp.ge.s32.totalorder %s34, 2
      %s36 = scalar_select %p35, 0, %s34
      %s37 = sadd.s32 1, %s21
      %s38 = scalar_select %p35, %s37, %s21
      %p39 = scmp.ge.s32.totalorder %s38, 2
      %s40 = scalar_select %p39, 0, %s38
      %s41 = ssub.s32 %s21, %s40
      %s42 = ssub.s32 %s22, %s36
      %s43 = sor.u32 %s41, %s42
      %s44 = ssub.s32 %s23, %s32
      %s45 = sor.u32 %s43, %s44
      %p46 = scmp.eq.s32.totalorder %s45, 0
      %s48 = sadd.s32 %s47, 1
      %s49 = scalar_select %p46, %s47, %s48
      %p52 = pneg %p46
      %p53 = scmp.eq.s32.totalorder %s14, 3
      %p54 = por %p52, %p53
      %p55 = scmp.ne.s32.totalorder %s47, %s50
      %p56 = scmp.eq.s32.totalorder %s14, 0
      %p57 = por %p55, %p56
      %p58 = scmp.ne.s32.totalorder %s47, %s50
      %p59 = scmp.eq.s32.totalorder %s19, 3
      %p60 = por %p58, %p59
      %p61 = scmp.ne.s32.totalorder %s50, %s51
      %p62 = scmp.eq.s32.totalorder %s19, 0
      %p63 = por %p61, %p62
      %p64 = scmp.ne.s32.totalorder %s50, %s51
      %p65 = scmp.eq.s32.totalorder %s20, 3
      %p66 = por %p64, %p65
      %p68 = scmp.ne.s32.totalorder %s51, %s67
      %p69 = scmp.eq.s32.totalorder %s20, 0
      %p70 = por %p68, %p69
      %s71 = ssub.s32 %s21, %s40
      %s72 = ssub.s32 %s23, %s32
      %s73 = sor.u32 %s71, %s72
      %p74 = scmp.eq.s32.totalorder %s73, 0
      %s76 = sadd.s32 %s75, 1
      %s77 = scalar_select %p74, %s75, %s76
      %p80 = pneg %p74
      %p81 = scmp.eq.s32.totalorder %s14, 3
      %p82 = por %p80, %p81
      %p83 = scmp.ne.s32.totalorder %s75, %s78
      %p84 = scmp.eq.s32.totalorder %s14, 0
      %p85 = por %p83, %p84
      %p86 = scmp.ne.s32.totalorder %s75, %s78
      %p87 = scmp.eq.s32.totalorder %s19, 3
      %p88 = por %p86, %p87
      %p89 = scmp.ne.s32.totalorder %s78, %s79
      %p90 = scmp.eq.s32.totalorder %s19, 0
      %p91 = por %p89, %p90
      %p92 = scmp.ne.s32.totalorder %s78, %s79
      %p93 = scmp.eq.s32.totalorder %s20, 3
      %p94 = por %p92, %p93
      %p96 = scmp.ne.s32.totalorder %s79, %s95
      %p97 = scmp.eq.s32.totalorder %s20, 0
      %p98 = por %p96, %p97
      %s99 = ssub.s32 %s21, %s40
      %p100 = scmp.eq.s32.totalorder %s99, 0
      %s102 = sadd.s32 %s101, 1
      %s103 = scalar_select %p100, %s101, %s102
      %p106 = pneg %p100
      %p107 = scmp.eq.s32.totalorder %s14, 3
      %p108 = por %p106, %p107
      %p109 = scmp.ne.s32.totalorder %s101, %s104
      %p110 = scmp.eq.s32.totalorder %s14, 0
      %p111 = por %p109, %p110
      %p112 = scmp.ne.s32.totalorder %s101, %s104
      %p113 = scmp.eq.s32.totalorder %s19, 3
      %p114 = por %p112, %p113
      %p115 = scmp.ne.s32.totalorder %s104, %s105
      %p116 = scmp.eq.s32.totalorder %s19, 0
      %p117 = por %p115, %p116
      %p118 = scmp.ne.s32.totalorder %s104, %s105
      %p119 = scmp.eq.s32.totalorder %s20, 3
      %p120 = por %p118, %p119
      %p122 = scmp.ne.s32.totalorder %s105, %s121
      %p123 = scmp.eq.s32.totalorder %s20, 0
      %p124 = por %p122, %p123
      %p125 = scmp.le.s32.totalorder 1, %s14
      %p126 = scmp.lt.s32.totalorder %s14, 5
      %p127 = pnand %p125, %p126
      %p128 = pneg %p127
      // Predicated region
      $region9: #{tpu_custom_call.1} parent=5 // pred_check
        _
      $region10: #{tpu_custom_call.1} parent=5 // pred_check_branch
        %130 = sbr.rel (%p127) target = $region12
      $region11: #{tpu_custom_call.1} parent=5 // pred_region
        %s131 = ssub.s32 %s14, 1
      $region12: #{tpu_custom_call.1} parent=5 // pred_fallthru
        _
      %p132 = scmp.lt.s32.totalorder %s14, 4
      // Predicated region
      $region13: #{tpu_custom_call.1} parent=5 // pred_check
        %p133 = pneg %p132
      $region14: #{tpu_custom_call.1} parent=5 // pred_check_branch
        %135 = sbr.rel (%p133) target = $region16
      $region15: #{tpu_custom_call.1} parent=5 // pred_region
        // Predicated region
        $region17: #{tpu_custom_call.1} parent=15 // pred_check
          %p136 = pneg %p57
        $region18: #{tpu_custom_call.1} parent=15 // pred_check_branch
          %138 = sbr.rel (%p136) target = $region20
        $region19: #{tpu_custom_call.1} parent=15 // pred_region
          %s139 = sand.u32 %s47, 1
          %s140 = scalar_lea.sflag [#allocation3], %s139
          %s141 = sand.u32 %s47, 1
          %s142 = smul.addr %s141, 16
          %s143 = scalar_lea.vmem [#allocation2], %s142
          %s144 = smul.u32 2, %s23
          %s146 = ssub.s32 256, 256
          %147 = vsyncadd %s140, %s146
          %s148 = smul.addr %s22, 2
          %s149 = sadd.s32 %s144, %s148
          %s150 = smul.addr %s21, 4
          %s151 = sadd.s32 %s149, %s150
          %s152 = smul.addr %s151, 128
          %s153 = scalar_lea.hbm %s0, %s152
          %s154 = sshll.u32 %s143, 4
          %s155 = int_to_ptr.vmem [resolvable:$true] %s154
          %160 = dma.hbm_to_vmem [thread:$0]  %s153, 256, %s155, %s140, 128, 128, 8
        $region20: #{tpu_custom_call.1} parent=15 // pred_fallthru
          _
        // Predicated region
        $region21: #{tpu_custom_call.1} parent=15 // pred_check
          %p161 = pneg %p85
        $region22: #{tpu_custom_call.1} parent=15 // pred_check_branch
          %163 = sbr.rel (%p161) target = $region24
        $region23: #{tpu_custom_call.1} parent=15 // pred_region
          %s164 = smul.u32 2, %s23
          %p165 = scmp.lt.s32.totalorder %s21, 1
          %s166 = scalar_select %p165, %s21, 1
          %p167 = scmp.lt.s32.totalorder %s164, 1
          %s168 = scalar_select %p167, %s164, 1
          %s169 = smul.addr %s166, 2
          %s170 = sadd.s32 %s168, %s169
          %s171 = smul.addr %s170, 8
          %s172 = scalar_lea.vmem %s1, %s171
          %s173 = smul.u32 2, %s23
        $region24: #{tpu_custom_call.1} parent=15 // pred_fallthru
          _
      $region16: #{tpu_custom_call.1} parent=5 // pred_fallthru
        _
      %p174 = scmp.le.s32.totalorder 1, %s14
      %p175 = scmp.lt.s32.totalorder %s14, 5
      %p176 = pnand %p174, %p175
      %p177 = pneg %p176
      // Predicated region
      $region25: #{tpu_custom_call.1} parent=5 // pred_check
        _
      $region26: #{tpu_custom_call.1} parent=5 // pred_check_branch
        %179 = sbr.rel (%p176) target = $region28
      $region27: #{tpu_custom_call.1} parent=5 // pred_region
        %s180 = ssub.s32 %s14, 1
        %s181 = sand.u32 %s50, 1
        %s182 = scalar_lea.sflag [#allocation3], %s181
        %s183 = sand.u32 %s50, 1
        %s184 = smul.addr %s183, 16
        %s185 = scalar_lea.vmem [#allocation2], %s184
        // Predicated region
        $region29: #{tpu_custom_call.1} parent=27 // pred_check
          %p186 = pneg %p63
        $region30: #{tpu_custom_call.1} parent=27 // pred_check_branch
          %188 = sbr.rel (%p186) target = $region32
        $region31: #{tpu_custom_call.1} parent=27 // pred_region
          %189 = dma.done %s182, 256
        $region32: #{tpu_custom_call.1} parent=27 // pred_fallthru
          _
        %s190 = sand.u32 %s50, 1
        %s191 = scalar_lea.sflag [#allocation3], %s190
        %s192 = sand.u32 %s50, 1
        %s193 = smul.addr %s192, 16
        %s194 = scalar_lea.vmem [#allocation2], %s193
        %p195 = pneg %p63
        %p196 = pneg %p60
        %s197 = smul.u32 2, %s26
        %p198 = scmp.lt.s32.totalorder %s24, 1
        %s199 = scalar_select %p198, %s24, 1
        %p200 = scmp.lt.s32.totalorder %s197, 1
        %s201 = scalar_select %p200, %s197, 1
        %s202 = smul.addr %s199, 2
        %s203 = sadd.s32 %s201, %s202
        %s204 = smul.addr %s203, 8
        %s205 = scalar_lea.vmem %s1, %s204
        %p206 = pneg %p91
        %p207 = pneg %p88
        %p208 = pneg %p117
        %p209 = pneg %p114
        %s210 = sand.u32 %s104, 1
        %s211 = scalar_lea.sflag [#allocation4], %s210
        %s212 = sand.u32 %s104, 1
        %s213 = smul.addr %s212, 8
        %s214 = scalar_lea.vmem [#allocation5], %s213
        %s215 = smul.u32 2, %s26
        %s216 = smul.u32 2, %s26
        %p217 = scmp.lt.s32.totalorder %s24, 1
        %s218 = scalar_select %p217, %s24, 1
        %p219 = scmp.lt.s32.totalorder %s216, 1
        %s220 = scalar_select %p219, %s216, 1
        %s221 = smul.addr %s218, 2
        %s222 = sadd.s32 %s220, %s221
        %s223 = smul.addr %s222, 8
        %s224 = scalar_lea.vmem %s1, %s223
        %s225 = smul.u32 2, %s26
        %p226 = scmp.eq.s32.totalorder %s25, 0
        %p227 = scmp.eq.s32.totalorder %s26, 0
        %p228 = pnand %p226, %p227
        %p229 = pneg %p228
        // Predicated region
        $region33: #{tpu_custom_call.1} parent=27 // pred_check
          _
        $region34: #{tpu_custom_call.1} parent=27 // pred_check_branch
          %231 = sbr.rel (%p228) target = $region36
        $region35: #{tpu_custom_call.1} parent=27 // pred_region
          %232 = vst [vmem:[%s214] sm:$0xff] 0.0
        $region36: #{tpu_custom_call.1} parent=27 // pred_fallthru
          _
        %v233 = vld [vmem:[%s185] sm:$0xff]
        %v234 = vld [vmem:[%s185 + $0x8] sm:$0xff]
        %v235 = vmul.f32 %v233, 10.0
        %v236 = vmul.f32 %v234, 10.0
        %v237 = vld [vmem:[%s224] sm:$0xff]
        %v238 = vld [vmem:[%s224 + $0x8] sm:$0xff]
        %239 = vmax.xlane.f32.xlu0 %v235
        %v240 = vpop.xlane.xlu0 %239
        %241 = vmax.xlane.f32.xlu0 %v236
        %v242 = vpop.xlane.xlu0 %241
        %v243 = vsub.f32 %v235, %v240
        %v244 = vsub.f32 %v236, %v242
        %v245 = vmul.f32 %v243, 1.442695
        %v246 = vpow.pop %v245
        %v247 = vmul.f32 %v244, 1.442695
        %v248 = vpow.pop %v247
        %249 = vadd.xlane.f32.xlu0 %v246
        %v250 = vpop.xlane.xlu0 %249
        %251 = vadd.xlane.f32.xlu0 %v248
        %v252 = vpop.xlane.xlu0 %251
        %v253 = vlaneseq
        %v254 = vand.u32 %v253, 127
        %255 = vset.pattern.permute.xlu0 0
        %256 = vperm.xlu0 %255, %v237
        %v257 = vpop.permute.xlu0 %256
        %258 = vset.pattern.permute.xlu0 0
        %259 = vperm.xlu0 %258, %v238
        %v260 = vpop.permute.xlu0 %259
        %vm261 = vcmp.eq.s32.totalorder %v254, %v257
        %vm262 = vcmp.eq.s32.totalorder %v254, %v260
        %v263 = vsel %vm261, %v243, 0.0
        %v264 = vsel %vm262, %v244, 0.0
        %265 = vadd.xlane.f32.xlu0 %v263
        %v266 = vpop.xlane.xlu0 %265
        %267 = vadd.xlane.f32.xlu0 %v264
        %v268 = vpop.xlane.xlu0 %267
        %vm269 = vcmp.ne.s32.totalorder %v237, 4294967295
        %vm270 = vcmp.ne.s32.totalorder %v238, 4294967295
        %v271 = vlog2.pop %v250
        %v272 = vmul.f32 %v271, 0.6931472
        %v273 = vlog2.pop %v252
        %v274 = vmul.f32 %v273, 0.6931472
        %v275 = vsub.f32 %v272, %v266
        %v276 = vsub.f32 %v274, %v268
        %v277 = vsel %vm269, %v275, 0.0
        %v278 = vsel %vm270, %v276, 0.0
        %vm279 = vcmask 7168
        %v280 = vsel %vm279, %v277, 0.0
        %v281 = vsel %vm279, %v278, 0.0
        %v282 = vadd.f32 %v280, %v281
        %283 = vadd.xlane.f32.xlu0 %v282
        %v284 = vpop.xlane.xlu0 %283
        %v285 = vrot.slane %v284, 4
        %v286 = vadd.f32 %v284, %v285
        %v287 = vrot.slane %v286, 2
        %v288 = vadd.f32 %v286, %v287
        %v289 = vrot.slane %v288, 1
        %v290 = vadd.f32 %v288, %v289
        %s291 = vtos %v290
        %v292 = vsel %vm269, 1, 0
        %v293 = vsel %vm270, 1, 0
        %v294 = vcvt.s32.f32 %v292
        %v295 = vcvt.s32.f32 %v293
        %v296 = vsel %vm279, %v294, 0.0
        %v297 = vsel %vm279, %v295, 0.0
        %v298 = vadd.f32 %v296, %v297
        %299 = vadd.xlane.f32.xlu0 %v298
        %v300 = vpop.xlane.xlu0 %299
        %v301 = vrot.slane %v300, 4
        %v302 = vadd.f32 %v300, %v301
        %v303 = vrot.slane %v302, 2
        %v304 = vadd.f32 %v302, %v303
        %v305 = vrot.slane %v304, 1
        %v306 = vadd.f32 %v304, %v305
        %s307 = vtos %v306
        %v308 = vld [vmem:[%s214] sm:$0xff]
        %vm309 = vcmp.eq.s32.totalorder %v254, 0
        %vm310 = vcmp.eq.s32.totalorder %v254, 1
        %v311 = vstv %s307
        %v312 = vsel %vm310, %v311, 0.0
        %v313 = vstv %s291
        %v314 = vsel %vm309, %v313, %v312
        %v315 = vadd.f32 %v308, %v314
        %316 = vst [vmem:[%s214] sm:$0xff] %v315
        %s317 = sand.u32 %s104, 1
        %s318 = scalar_lea.sflag [#allocation4], %s317
        %s319 = sand.u32 %s104, 1
        %s320 = smul.addr %s319, 8
        %s321 = scalar_lea.vmem [#allocation5], %s320
        // Predicated region
        $region37: #{tpu_custom_call.1} parent=27 // pred_check
          %p322 = pneg %p114
        $region38: #{tpu_custom_call.1} parent=27 // pred_check_branch
          %324 = sbr.rel (%p322) target = $region40
        $region39: #{tpu_custom_call.1} parent=27 // pred_region
          %s326 = ssub.s32 128, 128
          %327 = vsyncadd %s318, %s326
          %s328 = smul.addr %s24, 128
          %s329 = scalar_lea.hbm %s2, %s328
          %s331 = sshll.u32 %s321, 4
          %s332 = int_to_ptr.vmem [resolvable:$true] %s331
          %334 = dma.vmem_to_hbm [thread:$0]  %s332, 128, %s329, %s318
        $region40: #{tpu_custom_call.1} parent=27 // pred_fallthru
          _
      $region28: #{tpu_custom_call.1} parent=5 // pred_fallthru
        _
      %p335 = scmp.le.s32.totalorder 2, %s14
      // Predicated region
      $region41: #{tpu_custom_call.1} parent=5 // pred_check
        %p336 = pneg %p335
      $region42: #{tpu_custom_call.1} parent=5 // pred_check_branch
        %338 = sbr.rel (%p336) target = $region44
      $region43: #{tpu_custom_call.1} parent=5 // pred_region
        %s339 = ssub.s32 %s14, 2
        // Predicated region
        $region45: #{tpu_custom_call.1} parent=43 // pred_check
          %p340 = pneg %p120
        $region46: #{tpu_custom_call.1} parent=43 // pred_check_branch
          %342 = sbr.rel (%p340) target = $region48
        $region47: #{tpu_custom_call.1} parent=43 // pred_region
          %s343 = sand.u32 %s105, 1
          %s344 = scalar_lea.sflag [#allocation4], %s343
          %s345 = sand.u32 %s105, 1
          %s346 = smul.addr %s345, 8
          %s347 = scalar_lea.vmem [#allocation5], %s346
          %348 = dma.done %s344, 128
        $region48: #{tpu_custom_call.1} parent=43 // pred_fallthru
          _
      $region44: #{tpu_custom_call.1} parent=5 // pred_fallthru
        _
    $region6: #{tpu_custom_call.1} parent=1 // loop_footer
      %s18 = sadd.s32 1, %s14
    $region7: #{tpu_custom_call.1} parent=1 // loop_footer_branch
      %13 = sbr.rel target = $region3
    $region8: #{tpu_custom_call.1} parent=1 // loop_exit
      _
    %349 = vsyncpa [#allocation3], 1
    %s350 = scalar_lea.sflag [#allocation3], 1
    %351 = vsyncpa %s350, 1
    %352 = vsyncpa [#allocation4], 1
    %s353 = scalar_lea.sflag [#allocation4], 1
    %354 = vsyncpa %s353, 1

</llo_original>
